<compile_context>
chip_gen: v6e
topology: v6e:2x2x1
jax: 0.10.0
libtpu: 0.0.40
codegen_flags: <defaults>
</compile_context>

<pallas_src>
import functools
import math

import jax
import jax.numpy as jnp
from jax import lax
from jax.experimental import pallas as pl
from jax.experimental.pallas import tpu as pltpu

_LANE = 128     # last-dim (lane) tile width
_SUBLANE = 8    # second-to-last (sublane) tile height for f32
_NEG_BIG = -1e30


def _round_up(n, m):
    return ((n + m - 1) // m) * m


def _apply_activation(y, activation_name, valid_cols):
    """Activation on a (TM, F_pad) f32 block whose first `valid_cols` cols are real."""
    if activation_name == "Relu":
        return jnp.maximum(y, 0.0)
    if activation_name == "Sigmoid":
        return jax.nn.sigmoid(y)
    if activation_name == "Softmax":
        # nn.Softmax(dim=1); mask padded columns so they don't pollute the sum.
        col = lax.broadcasted_iota(jnp.int32, y.shape, dimension=1)
        valid = col < valid_cols
        ym = jnp.where(valid, y, _NEG_BIG)
        m = jnp.max(ym, axis=1, keepdims=True)
        e = jnp.where(valid, jnp.exp(ym - m), 0.0)
        denom = jnp.sum(e, axis=1, keepdims=True)
        return e / denom                      # exact divide (EUP-backed)
    if activation_name == "Tanh":
        return jnp.tanh(y)
    if activation_name == "Leaky_relu":
        # PyTorch default negative_slope = 0.01
        return jnp.where(y >= 0.0, y, 0.01 * y)
    if activation_name == "none":
        return y
    raise ValueError(f"Unsupported activation: {activation_name}")


def _fused_mlp_kernel(*refs, layer_acts, layer_widths, compute_dtype):
    # refs = (x_ref, w0_ref, b0_ref, ..., w_{L-1}_ref, b_{L-1}_ref, o_ref)
    x_ref = refs[0]
    o_ref = refs[-1]
    param_refs = refs[1:-1]

    h = x_ref[...].astype(jnp.float32)        # (TM, in_pad)
    for i, act in enumerate(layer_acts):      # static unroll; traced once
        w = param_refs[2 * i][...]            # (K_pad, N_pad), compute_dtype (bf16)
        b = param_refs[2 * i + 1][...]        # (1, N_pad), f32
        # bf16 operands -> native MXU; accumulate in f32.
        y = jnp.dot(h.astype(compute_dtype), w,
                    preferred_element_type=jnp.float32)
        y = y + b
        h = _apply_activation(y, act, layer_widths[i])   # elementwise in f32
    o_ref[...] = h.astype(o_ref.dtype)


def fused_mlp_forward(x_pad, params_flat, *, layer_acts, layer_widths,
                      pad_dims, tile_m, compute_dtype):
    """One fused pallas_call over the whole padded MLP, tiled on the batch axis."""
    b_pad, in_pad = x_pad.shape
    out_pad = pad_dims[-1]
    grid = (b_pad // tile_m,)

    in_specs = [pl.BlockSpec((tile_m, in_pad), lambda i: (i, 0))]
    for p in params_flat:
        # Constant index_map -> weights/biases stay VMEM-resident across batch tiles.
        in_specs.append(pl.BlockSpec(p.shape, lambda i: (0, 0)))
    out_spec = pl.BlockSpec((tile_m, out_pad), lambda i: (i, 0))

    kernel = functools.partial(
        _fused_mlp_kernel, layer_acts=layer_acts,
        layer_widths=layer_widths, compute_dtype=compute_dtype)

    # VMEM budget: resident params (x2 safety for BlockSpec buffering) +
    # double-buffered x/out tiles + in-flight f32 activation tiles + slack.
    param_bytes = sum(int(p.size) * p.dtype.itemsize for p in params_flat)
    max_w = max(pad_dims)
    act_bytes = 4 * tile_m * max_w
    io_bytes = 2 * 4 * tile_m * (in_pad + out_pad)
    vmem_bytes = 2 * param_bytes + io_bytes + 4 * act_bytes + (4 << 20)
    # Clamp to a budget that also fits v7x (64 MiB physical per TC).
    vmem_bytes = int(min(max(vmem_bytes, 32 << 20), 64 << 20))

    return pl.pallas_call(
        kernel,
        out_shape=jax.ShapeDtypeStruct((b_pad, out_pad), jnp.float32),
        grid=grid,
        in_specs=in_specs,
        out_specs=out_spec,
        compiler_params=pltpu.CompilerParams(
            dimension_semantics=("parallel",),
            vmem_limit_bytes=vmem_bytes),
    )(x_pad, *params_flat)


class PallasMLP:
    """JAX/Pallas port of the PyTorch MLP module (inference forward pass)."""

    def __init__(self, input_size, output_size, hidden_layer_sizes,
                 activation_name, p_dropout, key,
                 compute_dtype=jnp.bfloat16):
        if isinstance(hidden_layer_sizes, str):
            hidden_layer_sizes = eval(hidden_layer_sizes)
        self.input_size = input_size
        self.output_size = output_size
        self.hidden_layer_sizes = list(hidden_layer_sizes)
        self.activation_name = activation_name
        self.p_dropout = p_dropout
        self.compute_dtype = compute_dtype

        dims = [input_size] + self.hidden_layer_sizes + [output_size]
        self.dims = dims
        self.pad_dims = [_round_up(d, _LANE) for d in dims]

        self.weights = []   # logical f32 (fan_in, fan_out), used by the reference
        self.biases = []
        params_flat = []    # zero-padded, lane-dense, kernel dtypes
        for i in range(len(dims) - 1):
            fan_in, fan_out = dims[i], dims[i + 1]
            in_pad, out_pad = self.pad_dims[i], self.pad_dims[i + 1]
            key, kw, kb = jax.random.split(key, 3)
            # PyTorch nn.Linear default init: U(-1/sqrt(fan_in), 1/sqrt(fan_in))
            bound = 1.0 / math.sqrt(fan_in)
            w = jax.random.uniform(kw, (fan_in, fan_out), jnp.float32,
                                   minval=-bound, maxval=bound)
            b = jax.random.uniform(kb, (fan_out,), jnp.float32,
                                   minval=-bound, maxval=bound)
            self.weights.append(w)
            self.biases.append(b)
            # Weights padded + pre-cast to the MXU operand dtype; bias stays f32.
            w_pad = jnp.pad(w, ((0, in_pad - fan_in), (0, out_pad - fan_out)))
            b_pad = jnp.pad(b[None, :], ((0, 0), (0, out_pad - fan_out)))
            params_flat.append(w_pad.astype(compute_dtype))
            params_flat.append(b_pad.astype(jnp.float32))

        self._params_flat = tuple(params_flat)
        n_layers = len(dims) - 1
        # Hidden layers use the configured activation; the final Linear is
        # followed by the module-level Sigmoid (self.sigmoid in PyTorch).
        self._layer_acts = tuple(
            ("Sigmoid" if i == n_layers - 1 else activation_name)
            for i in range(n_layers))
        self._layer_widths = tuple(dims[i + 1] for i in range(n_layers))

        self._jit_forward = jax.jit(self._forward_impl)

    def _forward_impl(self, x, params_flat):
        B, D = x.shape
        # TM >= 256 for throughput batches (256-wide MXU on v6e/v7x, dual-TC
        # sharding on v7x via the "parallel" axis); tiny batches stay one tile.
        tile_m = 256 if B >= 256 else _round_up(max(B, 1), _SUBLANE)
        b_pad = _round_up(B, tile_m)
        x = x.astype(jnp.float32)
        x_pad = jnp.pad(x, ((0, b_pad - B), (0, self.pad_dims[0] - D)))
        out_pad = fused_mlp_forward(
            x_pad, params_flat,
            layer_acts=self._layer_acts,
            layer_widths=self._layer_widths,
            pad_dims=self.pad_dims,
            tile_m=tile_m,
            compute_dtype=self.compute_dtype)
        return out_pad[:B, :self.output_size]

    def forward(self, x):
        return self._jit_forward(x, self._params_flat)

    __call__ = forward


# ----------------------------- reference (pure JAX) -----------------------------

def _reference_activation(y, name):
    if name == "Relu":
        return jnp.maximum(y, 0.0)
    if name == "Sigmoid":
        return jax.nn.sigmoid(y)
    if name == "Softmax":
        return jax.nn.softmax(y, axis=1)
    if name == "Tanh":
        return jnp.tanh(y)
    if name == "Leaky_relu":
        return jnp.where(y >= 0.0, y, 0.01 * y)
    if name == "none":
        return y
    raise ValueError(f"Unsupported activation: {name}")


def _reference_forward(mlp, x):
    h = x
    n_layers = len(mlp.weights)
    for i in range(n_layers):
        h = jnp.dot(h, mlp.weights[i],
                    precision=lax.Precision.HIGHEST) + mlp.biases[i]
        if i == n_layers - 1:
            h = jax.nn.sigmoid(h)
        else:
            h = _reference_activation(h, mlp.activation_name)
    return h


if __name__ == "__main__":
    key = jax.random.PRNGKey(0)
    k_param, k_x = jax.random.split(key)

    batch = 8
    input_size = 32
    hidden_layer_sizes = [64, 32]
    output_size = 4

    mlp = PallasMLP(
        input_size=input_size,
        output_size=output_size,
        hidden_layer_sizes=hidden_layer_sizes,
        activation_name="Relu",
        p_dropout=0.1,
        key=k_param,
    )

    x = jax.random.normal(k_x, (batch, input_size), dtype=jnp.float32)

    out = mlp(x)
    out = jax.block_until_ready(out)

    ref = _reference_forward(mlp, x)
    assert out.shape == (batch, output_size)
    assert out.dtype == jnp.float32
    # Kernel uses native bf16 MXU operands (f32 accumulate); compare against
    # the f32 HIGHEST-precision reference with a correspondingly relaxed tol.
    assert jnp.allclose(out, ref, atol=2e-2, rtol=2e-2), "mismatch vs reference"

    print("KERNEL_OK")
</pallas_src>

<mosaic_0001>
module attributes {stable_mosaic.version = 11 : i64} {
  func.func @_fused_mlp_kernel(%arg0: i32, %arg1: memref<8x128xf32, #tpu.memory_space<vmem>>, %arg2: memref<128x128xbf16, #tpu.memory_space<vmem>>, %arg3: memref<1x128xf32, #tpu.memory_space<vmem>>, %arg4: memref<128x128xbf16, #tpu.memory_space<vmem>>, %arg5: memref<1x128xf32, #tpu.memory_space<vmem>>, %arg6: memref<128x128xbf16, #tpu.memory_space<vmem>>, %arg7: memref<1x128xf32, #tpu.memory_space<vmem>>, %arg8: memref<8x128xf32, #tpu.memory_space<vmem>>) attributes {dimension_semantics = [#tpu.dimension_semantics<parallel>], iteration_bounds = array<i64: 1>, scalar_prefetch = 0 : i64, scratch_operands = 0 : i64, tpu.core_type = #tpu.core_type<tc>, window_params = [{transform_indices = @transform_0, window_bounds = array<i64: 8, 128>}, {pipeline_mode = #tpu.pipeline_mode<synchronous>, transform_indices = @transform_1, window_bounds = array<i64: 128, 128>}, {pipeline_mode = #tpu.pipeline_mode<synchronous>, transform_indices = @transform_2, window_bounds = array<i64: 1, 128>}, {pipeline_mode = #tpu.pipeline_mode<synchronous>, transform_indices = @transform_3, window_bounds = array<i64: 128, 128>}, {pipeline_mode = #tpu.pipeline_mode<synchronous>, transform_indices = @transform_4, window_bounds = array<i64: 1, 128>}, {pipeline_mode = #tpu.pipeline_mode<synchronous>, transform_indices = @transform_5, window_bounds = array<i64: 128, 128>}, {pipeline_mode = #tpu.pipeline_mode<synchronous>, transform_indices = @transform_6, window_bounds = array<i64: 1, 128>}, {transform_indices = @transform_7, window_bounds = array<i64: 8, 128>}]} {
    %c0 = arith.constant 0 : index
    %c0_0 = arith.constant 0 : index
    %0 = vector.load %arg1[%c0, %c0_0] : memref<8x128xf32, #tpu.memory_space<vmem>>, vector<8x128xf32>
    %c0_1 = arith.constant 0 : index
    %c0_2 = arith.constant 0 : index
    %1 = vector.load %arg2[%c0_1, %c0_2] : memref<128x128xbf16, #tpu.memory_space<vmem>>, vector<128x128xbf16>
    %c0_3 = arith.constant 0 : index
    %c0_4 = arith.constant 0 : index
    %2 = vector.load %arg3[%c0_3, %c0_4] : memref<1x128xf32, #tpu.memory_space<vmem>>, vector<1x128xf32>
    %3 = arith.truncf %0 : vector<8x128xf32> to vector<8x128xbf16>
    %cst = arith.constant dense<0.000000e+00> : vector<8x128xf32>
    %4 = tpu.matmul %3, %1, %cst {dimension_numbers = #tpu.dot_dimension_numbers<[1], [0], [0], [1], [0, 0, 1, 1], [], []>} : vector<8x128xbf16>, vector<128x128xbf16>, vector<8x128xf32> -> vector<8x128xf32>
    %5 = vector.broadcast %2 : vector<1x128xf32> to vector<8x128xf32>
    %6 = arith.addf %4, %5 : vector<8x128xf32>
    %cst_5 = arith.constant 0.000000e+00 : f32
    %7 = vector.broadcast %cst_5 : f32 to vector<8x128xf32>
    %8 = arith.maximumf %6, %7 : vector<8x128xf32>
    %c0_6 = arith.constant 0 : index
    %c0_7 = arith.constant 0 : index
    %9 = vector.load %arg4[%c0_6, %c0_7] : memref<128x128xbf16, #tpu.memory_space<vmem>>, vector<128x128xbf16>
    %c0_8 = arith.constant 0 : index
    %c0_9 = arith.constant 0 : index
    %10 = vector.load %arg5[%c0_8, %c0_9] : memref<1x128xf32, #tpu.memory_space<vmem>>, vector<1x128xf32>
    %11 = arith.truncf %8 : vector<8x128xf32> to vector<8x128xbf16>
    %cst_10 = arith.constant dense<0.000000e+00> : vector<8x128xf32>
    %12 = tpu.matmul %11, %9, %cst_10 {dimension_numbers = #tpu.dot_dimension_numbers<[1], [0], [0], [1], [0, 0, 1, 1], [], []>} : vector<8x128xbf16>, vector<128x128xbf16>, vector<8x128xf32> -> vector<8x128xf32>
    %13 = vector.broadcast %10 : vector<1x128xf32> to vector<8x128xf32>
    %14 = arith.addf %12, %13 : vector<8x128xf32>
    %cst_11 = arith.constant 0.000000e+00 : f32
    %15 = vector.broadcast %cst_11 : f32 to vector<8x128xf32>
    %16 = arith.maximumf %14, %15 : vector<8x128xf32>
    %c0_12 = arith.constant 0 : index
    %c0_13 = arith.constant 0 : index
    %17 = vector.load %arg6[%c0_12, %c0_13] : memref<128x128xbf16, #tpu.memory_space<vmem>>, vector<128x128xbf16>
    %c0_14 = arith.constant 0 : index
    %c0_15 = arith.constant 0 : index
    %18 = vector.load %arg7[%c0_14, %c0_15] : memref<1x128xf32, #tpu.memory_space<vmem>>, vector<1x128xf32>
    %19 = arith.truncf %16 : vector<8x128xf32> to vector<8x128xbf16>
    %cst_16 = arith.constant dense<0.000000e+00> : vector<8x128xf32>
    %20 = tpu.matmul %19, %17, %cst_16 {dimension_numbers = #tpu.dot_dimension_numbers<[1], [0], [0], [1], [0, 0, 1, 1], [], []>} : vector<8x128xbf16>, vector<128x128xbf16>, vector<8x128xf32> -> vector<8x128xf32>
    %21 = vector.broadcast %18 : vector<1x128xf32> to vector<8x128xf32>
    %22 = arith.addf %20, %21 : vector<8x128xf32>
    %23 = arith.negf %22 : vector<8x128xf32>
    %24 = math.exp %23 : vector<8x128xf32>
    %cst_17 = arith.constant 1.000000e+00 : f32
    %25 = vector.broadcast %cst_17 : f32 to vector<8x128xf32>
    %26 = arith.addf %25, %24 : vector<8x128xf32>
    %27 = arith.divf %25, %26 : vector<8x128xf32>
    %c0_18 = arith.constant 0 : index
    %c0_19 = arith.constant 0 : index
    %28 = vector.load %arg8[%c0_18, %c0_19] : memref<8x128xf32, #tpu.memory_space<vmem>>, vector<8x128xf32>
    tpu.vector_store %arg8[%c0_18, %c0_19], %27 {strides = array<i32>} : memref<8x128xf32, #tpu.memory_space<vmem>>, vector<8x128xf32>,
    return
  }
  func.func @transform_0(%arg0: i32) -> (i32, i32) {
    %c0_i32 = arith.constant 0 : i32
    %c0_i32_0 = arith.constant 0 : i32
    return %arg0, %c0_i32 : i32, i32
  }
  func.func @transform_1(%arg0: i32) -> (i32, i32) {
    %c0_i32 = arith.constant 0 : i32
    %c0_i32_0 = arith.constant 0 : i32
    %c0_i32_1 = arith.constant 0 : i32
    return %c0_i32, %c0_i32_0 : i32, i32
  }
  func.func @transform_2(%arg0: i32) -> (i32, i32) {
    %c0_i32 = arith.constant 0 : i32
    %c0_i32_0 = arith.constant 0 : i32
    %c0_i32_1 = arith.constant 0 : i32
    return %c0_i32, %c0_i32_0 : i32, i32
  }
  func.func @transform_3(%arg0: i32) -> (i32, i32) {
    %c0_i32 = arith.constant 0 : i32
    %c0_i32_0 = arith.constant 0 : i32
    %c0_i32_1 = arith.constant 0 : i32
    return %c0_i32, %c0_i32_0 : i32, i32
  }
  func.func @transform_4(%arg0: i32) -> (i32, i32) {
    %c0_i32 = arith.constant 0 : i32
    %c0_i32_0 = arith.constant 0 : i32
    %c0_i32_1 = arith.constant 0 : i32
    return %c0_i32, %c0_i32_0 : i32, i32
  }
  func.func @transform_5(%arg0: i32) -> (i32, i32) {
    %c0_i32 = arith.constant 0 : i32
    %c0_i32_0 = arith.constant 0 : i32
    %c0_i32_1 = arith.constant 0 : i32
    return %c0_i32, %c0_i32_0 : i32, i32
  }
  func.func @transform_6(%arg0: i32) -> (i32, i32) {
    %c0_i32 = arith.constant 0 : i32
    %c0_i32_0 = arith.constant 0 : i32
    %c0_i32_1 = arith.constant 0 : i32
    return %c0_i32, %c0_i32_0 : i32, i32
  }
  func.func @transform_7(%arg0: i32) -> (i32, i32) {
    %c0_i32 = arith.constant 0 : i32
    %c0_i32_0 = arith.constant 0 : i32
    return %arg0, %c0_i32 : i32, i32
  }
}

</mosaic_0001>

<llo_original>
// kernel: _forward_impl.1
$region0: #{_forward_impl.1}
  #allocation0 [shape = 'u32[]', space=smem, size = 0x4, offset = 0x4, fixed_abs, tag = 'smem constant byte address 0x4 - core index']
  #allocation1 [shape = 'u32[144,128]{1,0:T(1,128)}', space=vmem, size = 0x12000, scoped, tag = 'internal scratch']
  %s0 = inlined_call_operand.vmem [shape: f32[8,128], index: 0, kind: input, shape index: {}]
  %s1 = inlined_call_operand.hbm [shape: bf16[128,128], index: 1, kind: input, shape index: {}]
  %s2 = inlined_call_operand.vmem [shape: f32[1,128], index: 2, kind: input, shape index: {}]
  %s3 = inlined_call_operand.hbm [shape: bf16[128,128], index: 3, kind: input, shape index: {}]
  %s4 = inlined_call_operand.vmem [shape: f32[1,128], index: 4, kind: input, shape index: {}]
  %s5 = inlined_call_operand.hbm [shape: bf16[128,128], index: 5, kind: input, shape index: {}]
  %s6 = inlined_call_operand.vmem [shape: f32[1,128], index: 6, kind: input, shape index: {}]
  %s7 = inlined_call_operand.vmem [shape: f32[8,128], index: 7, kind: output, shape index: {}]
  %s8 = sld [smem:[#allocation0]]
  $region50: #{_forward_impl.1} parent=0
    _
  %s10 = ssub.s32 1, %s8
  %s11 = scalar_select 0, %s10, %s8
  $region1: #{_forward_impl.1} parent=0
    #allocation2 [shape = 'u8[32768]{0}', space=vmem, size = 0x8000, scoped, tag = 'input window, operand 1, single buffered']
    #allocation3 [shape = 's32[1]{0}', space=sflag, size = 0x4, scoped, tag = 'scoped memory for _forward_impl.1']
    #allocation4 [shape = 'u8[32768]{0}', space=vmem, size = 0x8000, scoped, tag = 'input window, operand 3, single buffered']
    #allocation5 [shape = 's32[1]{0}', space=sflag, size = 0x4, scoped, tag = 'scoped memory for _forward_impl.1']
    #allocation6 [shape = 'u8[32768]{0}', space=vmem, size = 0x8000, scoped, tag = 'input window, operand 5, single buffered']
    %12 = vsyncpa [#allocation3], 0
    %13 = vsyncpa [#allocation5], 0
    // Predicated region
    $region2: #{_forward_impl.1} parent=1 // pred_check
      _
    $region3: #{_forward_impl.1} parent=1 // pred_check_branch
      %15 = sbr.rel (0) target = $region5
    $region4: #{_forward_impl.1} parent=1 // pred_region
      _
    $region5: #{_forward_impl.1} parent=1 // pred_fallthru
      _
    // Predicated region
    $region6: #{_forward_impl.1} parent=1 // pred_check
      _
    $region7: #{_forward_impl.1} parent=1 // pred_check_branch
      %17 = sbr.rel (0) target = $region9
    $region8: #{_forward_impl.1} parent=1 // pred_region
      %s19 = ssub.s32 1024, 1024
      %20 = vsyncadd [#allocation3], %s19
      %s21 = sshll.u32 [#allocation2], 4
      %s22 = int_to_ptr.vmem [resolvable:$true] %s21
      %27 = dma.hbm_to_vmem [thread:$0]  %s1, 1024, %s22, [#allocation3], 64, 64, 4
    $region9: #{_forward_impl.1} parent=1 // pred_fallthru
      _
    // Predicated region
    $region10: #{_forward_impl.1} parent=1 // pred_check
      _
    $region11: #{_forward_impl.1} parent=1 // pred_check_branch
      %29 = sbr.rel (0) target = $region13
    $region12: #{_forward_impl.1} parent=1 // pred_region
      _
    $region13: #{_forward_impl.1} parent=1 // pred_fallthru
      _
    // Predicated region
    $region14: #{_forward_impl.1} parent=1 // pred_check
      _
    $region15: #{_forward_impl.1} parent=1 // pred_check_branch
      %31 = sbr.rel (0) target = $region17
    $region16: #{_forward_impl.1} parent=1 // pred_region
      %s33 = ssub.s32 1024, 1024
      %34 = vsyncadd [#allocation5], %s33
      %s35 = sshll.u32 [#allocation4], 4
      %s36 = int_to_ptr.vmem [resolvable:$true] %s35
      %41 = dma.hbm_to_vmem [thread:$0]  %s3, 1024, %s36, [#allocation5], 64, 64, 4
    $region17: #{_forward_impl.1} parent=1 // pred_fallthru
      _
    // Predicated region
    $region18: #{_forward_impl.1} parent=1 // pred_check
      _
    $region19: #{_forward_impl.1} parent=1 // pred_check_branch
      %43 = sbr.rel (0) target = $region21
    $region20: #{_forward_impl.1} parent=1 // pred_region
      _
    $region21: #{_forward_impl.1} parent=1 // pred_fallthru
      _
    // Predicated region
    $region22: #{_forward_impl.1} parent=1 // pred_check
      _
    $region23: #{_forward_impl.1} parent=1 // pred_check_branch
      %45 = sbr.rel (0) target = $region25
    $region24: #{_forward_impl.1} parent=1 // pred_region
      %s47 = ssub.s32 1024, 1024
      %48 = vsyncadd [#allocation5], %s47
      %s49 = sshll.u32 [#allocation6], 4
      %s50 = int_to_ptr.vmem [resolvable:$true] %s49
      %55 = dma.hbm_to_vmem [thread:$0]  %s5, 1024, %s50, [#allocation5], 64, 64, 4
    $region25: #{_forward_impl.1} parent=1 // pred_fallthru
      _
    // Predicated region
    $region26: #{_forward_impl.1} parent=1 // pred_check
      _
    $region27: #{_forward_impl.1} parent=1 // pred_check_branch
      %57 = sbr.rel (0) target = $region29
    $region28: #{_forward_impl.1} parent=1 // pred_region
      _
    $region29: #{_forward_impl.1} parent=1 // pred_fallthru
      _
    // Predicated region
    $region30: #{_forward_impl.1} parent=1 // pred_check
      _
    $region31: #{_forward_impl.1} parent=1 // pred_check_branch
      %59 = sbr.rel (0) target = $region33
    $region32: #{_forward_impl.1} parent=1 // pred_region
      %60 = dma.done [#allocation3], 1024
    $region33: #{_forward_impl.1} parent=1 // pred_fallthru
      _
    // Predicated region
    $region34: #{_forward_impl.1} parent=1 // pred_check
      _
    $region35: #{_forward_impl.1} parent=1 // pred_check_branch
      %62 = sbr.rel (0) target = $region37
    $region36: #{_forward_impl.1} parent=1 // pred_region
      %63 = dma.done [#allocation5], 1024
    $region37: #{_forward_impl.1} parent=1 // pred_fallthru
      _
    // Predicated region
    $region38: #{_forward_impl.1} parent=1 // pred_check
      _
    $region39: #{_forward_impl.1} parent=1 // pred_check_branch
      %65 = sbr.rel (0) target = $region41
    $region40: #{_forward_impl.1} parent=1 // pred_region
      %66 = dma.done [#allocation5], 1024
    $region41: #{_forward_impl.1} parent=1 // pred_fallthru
      _
    %v68 = vld [vmem:[%s0] sm:$0xff]
    %v69 = vld [vmem:[#allocation2] sm:$0xf]
    %v70 = vld [vmem:[#allocation2 + $0x4] sm:$0xf]
    %v71 = vld [vmem:[#allocation2 + $0x8] sm:$0xf]
    %v72 = vld [vmem:[#allocation2 + $0xc] sm:$0xf]
    %v73 = vld [vmem:[#allocation2 + $0x10] sm:$0xf]
    %v74 = vld [vmem:[#allocation2 + $0x14] sm:$0xf]
    %v75 = vld [vmem:[#allocation2 + $0x18] sm:$0xf]
    %v76 = vld [vmem:[#allocation2 + $0x1c] sm:$0xf]
    %v77 = vld [vmem:[#allocation2 + $0x20] sm:$0xf]
    %v78 = vld [vmem:[#allocation2 + $0x24] sm:$0xf]
    %v79 = vld [vmem:[#allocation2 + $0x28] sm:$0xf]
    %v80 = vld [vmem:[#allocation2 + $0x2c] sm:$0xf]
    %v81 = vld [vmem:[#allocation2 + $0x30] sm:$0xf]
    %v82 = vld [vmem:[#allocation2 + $0x34] sm:$0xf]
    %v83 = vld [vmem:[#allocation2 + $0x38] sm:$0xf]
    %v84 = vld [vmem:[#allocation2 + $0x3c] sm:$0xf]
    %v85 = vld [vmem:[%s2] sm:$0x1]
    %v86 = vpack.c.bf16 %v68, %v68
    %v88 = vlaneseq
    %v89 = vshrl.u32 %v88, 7
    %v90 = vsub.s32 0, %v89
    %v91 = vrot.slane %v85, %v90
    %v109 = vunpack.c.l.b16 %v69
    %v110 = vunpack.c.l.b16 %v70
    %v111 = vunpack.c.l.b16 %v71
    %v112 = vunpack.c.l.b16 %v72
    %v113 = vunpack.c.l.b16 %v73
    %v114 = vunpack.c.l.b16 %v74
    %v115 = vunpack.c.l.b16 %v75
    %v116 = vunpack.c.l.b16 %v76
    %v117 = vunpack.c.l.b16 %v77
    %v118 = vunpack.c.l.b16 %v78
    %v119 = vunpack.c.l.b16 %v79
    %v120 = vunpack.c.l.b16 %v80
    %v121 = vunpack.c.l.b16 %v81
    %v122 = vunpack.c.l.b16 %v82
    %v123 = vunpack.c.l.b16 %v83
    %v124 = vunpack.c.l.b16 %v84
    %v125 = vpack.c.b16 %v110, %v109
    %v126 = vpack.c.b16 %v112, %v111
    %v127 = vpack.c.b16 %v114, %v113
    %v128 = vpack.c.b16 %v116, %v115
    %v129 = vpack.c.b16 %v118, %v117
    %v130 = vpack.c.b16 %v120, %v119
    %v131 = vpack.c.b16 %v122, %v121
    %v132 = vpack.c.b16 %v124, %v123
    %141 = vmatprep.subr.bf16.mxu0 0
    %142 = vmatpush1.bf16.msra.mxu0 %v132
    %143 = vmatprep.subr.bf16.mxu0 0
    %144 = vmatpush1.bf16.msra.mxu0 %v131
    %145 = vmatprep.subr.bf16.mxu0 0
    %146 = vmatpush1.bf16.msra.mxu0 %v130
    %147 = vmatprep.subr.bf16.mxu0 0
    %148 = vmatpush1.bf16.msra.mxu0 %v129
    %149 = vmatprep.subr.bf16.mxu0 0
    %150 = vmatpush1.bf16.msra.mxu0 %v128
    %151 = vmatprep.subr.bf16.mxu0 0
    %152 = vmatpush1.bf16.msra.mxu0 %v127
    %153 = vmatprep.subr.bf16.mxu0 0
    %154 = vmatpush1.bf16.msra.mxu0 %v126
    %155 = vmatprep.subr.bf16.mxu0 0
    %156 = vmatpush1.bf16.msra.mxu0 %v125
    %157 = vmatprep.subr.bf16.mxu0 0
    %158 = vmatpush2.bf16.msra.mxu0 0
    %159 = vmatprep.subr.bf16.mxu0 0
    %160 = vmatpush2.bf16.msra.mxu0 0
    %161 = vmatprep.subr.bf16.mxu0 0
    %162 = vmatpush2.bf16.msra.mxu0 0
    %163 = vmatprep.subr.bf16.mxu0 0
    %164 = vmatpush2.bf16.msra.mxu0 0
    %165 = vmatprep.subr.bf16.mxu0 0
    %166 = vmatpush2.bf16.msra.mxu0 0
    %167 = vmatprep.subr.bf16.mxu0 0
    %168 = vmatpush2.bf16.msra.mxu0 0
    %169 = vmatprep.subr.bf16.mxu0 0
    %170 = vmatpush2.bf16.msra.mxu0 0
    %171 = vmatprep.subr.bf16.mxu0 0
    %172 = vmatpush2.bf16.msra.mxu0 0
    %173 = vmatprep.mubr.bf16.mxu0 0
    %174 = vmatmul.mubr.bf16.gmra.mxu0 %v86
    %v175 = vpop.f32.mrf.mxu0
    %v176 = vadd.f32 %v91, %v175
    %v177 = vpop.f32.mrf.mxu0
    %v178 = vpop.f32.mrf.mxu0
    %v179 = vpop.f32.mrf.mxu0
    %180 = vdwg.mxu0
    %v181 = vmax.f32 %v176, 0.0
    %v182 = vld [vmem:[#allocation4] sm:$0xf]
    %v183 = vld [vmem:[#allocation4 + $0x4] sm:$0xf]
    %v184 = vld [vmem:[#allocation4 + $0x8] sm:$0xf]
    %v185 = vld [vmem:[#allocation4 + $0xc] sm:$0xf]
    %v186 = vld [vmem:[#allocation4 + $0x10] sm:$0xf]
    %v187 = vld [vmem:[#allocation4 + $0x14] sm:$0xf]
    %v188 = vld [vmem:[#allocation4 + $0x18] sm:$0xf]
    %v189 = vld [vmem:[#allocation4 + $0x1c] sm:$0xf]
    %v190 = vld [vmem:[#allocation4 + $0x20] sm:$0xf]
    %v191 = vld [vmem:[#allocation4 + $0x24] sm:$0xf]
    %v192 = vld [vmem:[#allocation4 + $0x28] sm:$0xf]
    %v193 = vld [vmem:[#allocation4 + $0x2c] sm:$0xf]
    %v194 = vld [vmem:[#allocation4 + $0x30] sm:$0xf]
    %v195 = vld [vmem:[#allocation4 + $0x34] sm:$0xf]
    %v196 = vld [vmem:[#allocation4 + $0x38] sm:$0xf]
    %v197 = vld [vmem:[#allocation4 + $0x3c] sm:$0xf]
    %v198 = vld [vmem:[%s4] sm:$0x1]
    %v199 = vpack.c.bf16 %v181, %v181
    %v201 = vlaneseq
    %v202 = vshrl.u32 %v201, 7
    %v203 = vsub.s32 0, %v202
    %v204 = vrot.slane %v198, %v203
    %v222 = vunpack.c.l.b16 %v182
    %v223 = vunpack.c.l.b16 %v183
    %v224 = vunpack.c.l.b16 %v184
    %v225 = vunpack.c.l.b16 %v185
    %v226 = vunpack.c.l.b16 %v186
    %v227 = vunpack.c.l.b16 %v187
    %v228 = vunpack.c.l.b16 %v188
    %v229 = vunpack.c.l.b16 %v189
    %v230 = vunpack.c.l.b16 %v190
    %v231 = vunpack.c.l.b16 %v191
    %v232 = vunpack.c.l.b16 %v192
    %v233 = vunpack.c.l.b16 %v193
    %v234 = vunpack.c.l.b16 %v194
    %v235 = vunpack.c.l.b16 %v195
    %v236 = vunpack.c.l.b16 %v196
    %v237 = vunpack.c.l.b16 %v197
    %v238 = vpack.c.b16 %v223, %v222
    %v239 = vpack.c.b16 %v225, %v224
    %v240 = vpack.c.b16 %v227, %v226
    %v241 = vpack.c.b16 %v229, %v228
    %v242 = vpack.c.b16 %v231, %v230
    %v243 = vpack.c.b16 %v233, %v232
    %v244 = vpack.c.b16 %v235, %v234
    %v245 = vpack.c.b16 %v237, %v236
    %254 = vmatprep.subr.bf16.mxu0 0
    %255 = vmatpush1.bf16.msra.mxu0 %v245
    %256 = vmatprep.subr.bf16.mxu0 0
    %257 = vmatpush1.bf16.msra.mxu0 %v244
    %258 = vmatprep.subr.bf16.mxu0 0
    %259 = vmatpush1.bf16.msra.mxu0 %v243
    %260 = vmatprep.subr.bf16.mxu0 0
    %261 = vmatpush1.bf16.msra.mxu0 %v242
    %262 = vmatprep.subr.bf16.mxu0 0
    %263 = vmatpush1.bf16.msra.mxu0 %v241
    %264 = vmatprep.subr.bf16.mxu0 0
    %265 = vmatpush1.bf16.msra.mxu0 %v240
    %266 = vmatprep.subr.bf16.mxu0 0
    %267 = vmatpush1.bf16.msra.mxu0 %v239
    %268 = vmatprep.subr.bf16.mxu0 0
    %269 = vmatpush1.bf16.msra.mxu0 %v238
    %270 = vmatprep.subr.bf16.mxu0 0
    %271 = vmatpush2.bf16.msra.mxu0 0
    %272 = vmatprep.subr.bf16.mxu0 0
    %273 = vmatpush2.bf16.msra.mxu0 0
    %274 = vmatprep.subr.bf16.mxu0 0
    %275 = vmatpush2.bf16.msra.mxu0 0
    %276 = vmatprep.subr.bf16.mxu0 0
    %277 = vmatpush2.bf16.msra.mxu0 0
    %278 = vmatprep.subr.bf16.mxu0 0
    %279 = vmatpush2.bf16.msra.mxu0 0
    %280 = vmatprep.subr.bf16.mxu0 0
    %281 = vmatpush2.bf16.msra.mxu0 0
    %282 = vmatprep.subr.bf16.mxu0 0
    %283 = vmatpush2.bf16.msra.mxu0 0
    %284 = vmatprep.subr.bf16.mxu0 0
    %285 = vmatpush2.bf16.msra.mxu0 0
    %286 = vmatprep.mubr.bf16.mxu0 0
    %287 = vmatmul.mubr.bf16.gmra.mxu0 %v199
    %v288 = vpop.f32.mrf.mxu0
    %v289 = vadd.f32 %v204, %v288
    %v290 = vpop.f32.mrf.mxu0
    %v291 = vpop.f32.mrf.mxu0
    %v292 = vpop.f32.mrf.mxu0
    %293 = vdwg.mxu0
    %v294 = vmax.f32 %v289, 0.0
    %v295 = vld [vmem:[#allocation6] sm:$0xf]
    %v296 = vld [vmem:[#allocation6 + $0x4] sm:$0xf]
    %v297 = vld [vmem:[#allocation6 + $0x8] sm:$0xf]
    %v298 = vld [vmem:[#allocation6 + $0xc] sm:$0xf]
    %v299 = vld [vmem:[#allocation6 + $0x10] sm:$0xf]
    %v300 = vld [vmem:[#allocation6 + $0x14] sm:$0xf]
    %v301 = vld [vmem:[#allocation6 + $0x18] sm:$0xf]
    %v302 = vld [vmem:[#allocation6 + $0x1c] sm:$0xf]
    %v303 = vld [vmem:[#allocation6 + $0x20] sm:$0xf]
    %v304 = vld [vmem:[#allocation6 + $0x24] sm:$0xf]
    %v305 = vld [vmem:[#allocation6 + $0x28] sm:$0xf]
    %v306 = vld [vmem:[#allocation6 + $0x2c] sm:$0xf]
    %v307 = vld [vmem:[#allocation6 + $0x30] sm:$0xf]
    %v308 = vld [vmem:[#allocation6 + $0x34] sm:$0xf]
    %v309 = vld [vmem:[#allocation6 + $0x38] sm:$0xf]
    %v310 = vld [vmem:[#allocation6 + $0x3c] sm:$0xf]
    %v311 = vld [vmem:[%s6] sm:$0x1]
    %v312 = vpack.c.bf16 %v294, %v294
    %v314 = vlaneseq
    %v315 = vshrl.u32 %v314, 7
    %v316 = vsub.s32 0, %v315
    %v317 = vrot.slane %v311, %v316
    %v335 = vunpack.c.l.b16 %v295
    %v336 = vunpack.c.l.b16 %v296
    %v337 = vunpack.c.l.b16 %v297
    %v338 = vunpack.c.l.b16 %v298
    %v339 = vunpack.c.l.b16 %v299
    %v340 = vunpack.c.l.b16 %v300
    %v341 = vunpack.c.l.b16 %v301
    %v342 = vunpack.c.l.b16 %v302
    %v343 = vunpack.c.l.b16 %v303
    %v344 = vunpack.c.l.b16 %v304
    %v345 = vunpack.c.l.b16 %v305
    %v346 = vunpack.c.l.b16 %v306
    %v347 = vunpack.c.l.b16 %v307
    %v348 = vunpack.c.l.b16 %v308
    %v349 = vunpack.c.l.b16 %v309
    %v350 = vunpack.c.l.b16 %v310
    %v351 = vpack.c.b16 %v336, %v335
    %v352 = vpack.c.b16 %v338, %v337
    %v353 = vpack.c.b16 %v340, %v339
    %v354 = vpack.c.b16 %v342, %v341
    %v355 = vpack.c.b16 %v344, %v343
    %v356 = vpack.c.b16 %v346, %v345
    %v357 = vpack.c.b16 %v348, %v347
    %v358 = vpack.c.b16 %v350, %v349
    %367 = vmatprep.subr.bf16.mxu0 0
    %368 = vmatpush1.bf16.msra.mxu0 %v358
    %369 = vmatprep.subr.bf16.mxu0 0
    %370 = vmatpush1.bf16.msra.mxu0 %v357
    %371 = vmatprep.subr.bf16.mxu0 0
    %372 = vmatpush1.bf16.msra.mxu0 %v356
    %373 = vmatprep.subr.bf16.mxu0 0
    %374 = vmatpush1.bf16.msra.mxu0 %v355
    %375 = vmatprep.subr.bf16.mxu0 0
    %376 = vmatpush1.bf16.msra.mxu0 %v354
    %377 = vmatprep.subr.bf16.mxu0 0
    %378 = vmatpush1.bf16.msra.mxu0 %v353
    %379 = vmatprep.subr.bf16.mxu0 0
    %380 = vmatpush1.bf16.msra.mxu0 %v352
    %381 = vmatprep.subr.bf16.mxu0 0
    %382 = vmatpush1.bf16.msra.mxu0 %v351
    %383 = vmatprep.subr.bf16.mxu0 0
    %384 = vmatpush2.bf16.msra.mxu0 0
    %385 = vmatprep.subr.bf16.mxu0 0
    %386 = vmatpush2.bf16.msra.mxu0 0
    %387 = vmatprep.subr.bf16.mxu0 0
    %388 = vmatpush2.bf16.msra.mxu0 0
    %389 = vmatprep.subr.bf16.mxu0 0
    %390 = vmatpush2.bf16.msra.mxu0 0
    %391 = vmatprep.subr.bf16.mxu0 0
    %392 = vmatpush2.bf16.msra.mxu0 0
    %393 = vmatprep.subr.bf16.mxu0 0
    %394 = vmatpush2.bf16.msra.mxu0 0
    %395 = vmatprep.subr.bf16.mxu0 0
    %396 = vmatpush2.bf16.msra.mxu0 0
    %397 = vmatprep.subr.bf16.mxu0 0
    %398 = vmatpush2.bf16.msra.mxu0 0
    %399 = vmatprep.mubr.bf16.mxu0 0
    %400 = vmatmul.mubr.bf16.gmra.mxu0 %v312
    %v401 = vpop.f32.mrf.mxu0
    %v402 = vadd.f32 %v317, %v401
    %v403 = vpop.f32.mrf.mxu0
    %v404 = vpop.f32.mrf.mxu0
    %v405 = vpop.f32.mrf.mxu0
    %406 = vdwg.mxu0
    %v407 = vxor.u32 %v402, 2147483648
    %v408 = vmul.f32 %v407, 1.442695
    %v409 = vpow.pop %v408
    %v410 = vadd.f32 %v409, 1.0
    %v411 = vrcp.pop %v410
    %v412 = vmul.f32 1.0, %v411
    %413 = vst [vmem:[%s7] sm:$0xff] %v412
    // Predicated region
    $region42: #{_forward_impl.1} parent=1 // pred_check
      _
    $region43: #{_forward_impl.1} parent=1 // pred_check_branch
      %415 = sbr.rel (0) target = $region45
    $region44: #{_forward_impl.1} parent=1 // pred_region
      _
    $region45: #{_forward_impl.1} parent=1 // pred_fallthru
      _
    // Predicated region
    $region46: #{_forward_impl.1} parent=1 // pred_check
      _
    $region47: #{_forward_impl.1} parent=1 // pred_check_branch
      %417 = sbr.rel (0) target = $region49
    $region48: #{_forward_impl.1} parent=1 // pred_region
      _
    $region49: #{_forward_impl.1} parent=1 // pred_fallthru
      _
    %418 = vsyncpa [#allocation3], 1
    %419 = vsyncpa [#allocation5], 1

</llo_original>
